<compile_context>
chip_gen: v5e
topology: v5e:2x2
jax: 0.10.0
libtpu: 0.0.40
codegen_flags: <defaults>
</compile_context>

<pallas_src>
import math

import jax
import jax.numpy as jnp
from jax.experimental import pallas as pl
from jax.experimental.pallas import tpu as pltpu


def _one_hot_kernel(ids_ref, o_ref):
    # ids_ref: (TR, 1) int32 token ids (sublane column)
    # o_ref:   (TR, TH) one-hot output tile for class-block j
    th = o_ref.shape[1]
    col0 = pl.program_id(1) * th
    shifted = ids_ref[...] - col0                              # (TR, 1)  VPU
    classes = jax.lax.broadcasted_iota(jnp.int32, (1, th), 1)  # (1, TH)  lane iota
    o_ref[...] = (shifted == classes).astype(o_ref.dtype)      # broadcast compare


def _round_up(n, m):
    return ((n + m - 1) // m) * m


def one_hot_embedding(x, hidden_size, *, out_dtype=jnp.float32,
                      col_tile_max=2048, target_tile_bytes=8 * 1024 * 1024):
    """x: integer token ids in [0, hidden_size). Returns (*x.shape, hidden_size)."""
    orig_shape = x.shape
    H = int(hidden_size)
    N = int(math.prod(orig_shape)) if orig_shape else 1

    ids = x.reshape(-1).astype(jnp.int32).reshape(N, 1)

    # Class-axis tile: full H when it fits (block == full array dim satisfies the
    # (8,128) rule); otherwise a multiple of 128 with a masked ragged tail block.
    TH = H if H <= col_tile_max else col_tile_max

    itemsize = jnp.dtype(out_dtype).itemsize
    # Row-axis tile: keep each output tile around target_tile_bytes (~8 MiB) so the
    # ~0.35 us per-grid-step overhead stays negligible, while 2x double-buffered
    # output tiles remain well under v7x's 32 MiB scoped VMEM.
    rows_budget = max(8, (target_tile_bytes // (TH * itemsize)) // 8 * 8)
    if N % 8 == 0:
        TR = min(N, rows_budget)          # multiple of 8
    elif N <= rows_budget:
        TR = N                            # block equals full row extent
    else:
        TR = rows_budget                  # multiple of 8; ragged tail masked on store

    grid = (pl.cdiv(N, TR), pl.cdiv(H, TH))

    out = pl.pallas_call(
        _one_hot_kernel,
        out_shape=jax.ShapeDtypeStruct((N, H), out_dtype),
        grid_spec=pltpu.PrefetchScalarGridSpec(
            num_scalar_prefetch=0,
            grid=grid,
            in_specs=[pl.BlockSpec((TR, 1), lambda i, j: (i, 0))],
            out_specs=pl.BlockSpec((TR, TH), lambda i, j: (i, j)),
        ),
        compiler_params=pltpu.CompilerParams(
            dimension_semantics=("parallel", "parallel"),
            vmem_limit_bytes=32 * 1024 * 1024,
        ),
        cost_estimate=pl.CostEstimate(
            flops=N * H,
            transcendentals=0,
            bytes_accessed=N * H * itemsize + N * 4,
        ),
    )(ids)

    return out.reshape(*orig_shape, H)


if __name__ == "__main__":
    key = jax.random.PRNGKey(0)

    # Primary check: (B, S) = (2, 8), hidden_size = 32.
    B, S, H = 2, 8, 32
    x = jax.random.randint(key, (B, S), minval=0, maxval=H, dtype=jnp.int32)
    out = jax.block_until_ready(one_hot_embedding(x, hidden_size=H))
    ref = jax.nn.one_hot(x, H, dtype=jnp.float32)
    assert out.shape == (B, S, H), out.shape
    assert out.dtype == jnp.float32, out.dtype
    assert bool(jnp.all(out == ref)), "mismatch vs reference one-hot (2,8,32)"

    # Ragged-shape check: rows not a multiple of 8, classes not a multiple of 128,
    # emitted directly at (N, H) with no post-kernel slice.
    B2, S2, H2 = 3, 5, 200
    x2 = jax.random.randint(jax.random.PRNGKey(1), (B2, S2), minval=0, maxval=H2,
                            dtype=jnp.int32)
    out2 = jax.block_until_ready(one_hot_embedding(x2, hidden_size=H2))
    ref2 = jax.nn.one_hot(x2, H2, dtype=jnp.float32)
    assert out2.shape == (B2, S2, H2), out2.shape
    assert bool(jnp.all(out2 == ref2)), "mismatch vs reference one-hot (3,5,200)"

    # Tiled-grid check: force column tiling (ragged tail class block) and row tiling
    # (ragged tail row block) with tiny tile overrides to exercise the masking paths.
    B3, S3, H3 = 2, 10, 200
    x3 = jax.random.randint(jax.random.PRNGKey(2), (B3, S3), minval=0, maxval=H3,
                            dtype=jnp.int32)
    out3 = jax.block_until_ready(
        one_hot_embedding(x3, hidden_size=H3, col_tile_max=128, target_tile_bytes=1))
    ref3 = jax.nn.one_hot(x3, H3, dtype=jnp.float32)
    assert bool(jnp.all(out3 == ref3)), "mismatch vs reference one-hot (tiled grid)"

    # bf16 output variant (exact for 0/1, halves store bytes if downstream accepts it).
    out_bf16 = jax.block_until_ready(
        one_hot_embedding(x, hidden_size=H, out_dtype=jnp.bfloat16))
    assert out_bf16.dtype == jnp.bfloat16
    assert bool(jnp.all(out_bf16.astype(jnp.float32) == ref)), "bf16 variant mismatch"

    print("KERNEL_OK")
</pallas_src>

<mosaic_0001>
module attributes {stable_mosaic.version = 11 : i64} {
  func.func @_one_hot_kernel(%arg0: i32, %arg1: i32, %arg2: memref<16x1xi32, #tpu.memory_space<vmem>>, %arg3: memref<16x32xf32, #tpu.memory_space<vmem>>) attributes {dimension_semantics = [#tpu.dimension_semantics<parallel>, #tpu.dimension_semantics<parallel>], iteration_bounds = array<i64: 1, 1>, scalar_prefetch = 0 : i64, scratch_operands = 0 : i64, tpu.core_type = #tpu.core_type<tc>, window_params = [{transform_indices = @transform_0, window_bounds = array<i64: 16, 1>}, {transform_indices = @transform_1, window_bounds = array<i64: 16, 32>}]} {
    %c32_i32 = arith.constant 32 : i32
    %0 = arith.muli %arg1, %c32_i32 : i32
    %c0 = arith.constant 0 : index
    %c0_0 = arith.constant 0 : index
    %1 = vector.load %arg2[%c0, %c0_0] : memref<16x1xi32, #tpu.memory_space<vmem>>, vector<16x1xi32>
    %2 = vector.broadcast %0 : i32 to vector<16x1xi32>
    %3 = arith.subi %1, %2 : vector<16x1xi32>
    %4 = tpu.iota {dimensions = array<i32: 1>} : vector<1x32xi32>
    %5 = vector.broadcast %3 : vector<16x1xi32> to vector<16x32xi32>
    %6 = vector.broadcast %4 : vector<1x32xi32> to vector<16x32xi32>
    %7 = arith.cmpi eq, %5, %6 : vector<16x32xi32>
    %8 = arith.extui %7 : vector<16x32xi1> to vector<16x32xi32>
    %9 = arith.sitofp %8 : vector<16x32xi32> to vector<16x32xf32>
    %c0_1 = arith.constant 0 : index
    %c0_2 = arith.constant 0 : index
    %10 = vector.load %arg3[%c0_1, %c0_2] : memref<16x32xf32, #tpu.memory_space<vmem>>, vector<16x32xf32>
    tpu.vector_store %arg3[%c0_1, %c0_2], %9 {strides = array<i32>} : memref<16x32xf32, #tpu.memory_space<vmem>>, vector<16x32xf32>,
    return
  }
  func.func @transform_0(%arg0: i32, %arg1: i32) -> (i32, i32) {
    %c0_i32 = arith.constant 0 : i32
    %c0_i32_0 = arith.constant 0 : i32
    return %arg0, %c0_i32 : i32, i32
  }
  func.func @transform_1(%arg0: i32, %arg1: i32) -> (i32, i32) {
    %c0_i32 = arith.constant 0 : i32
    return %arg0, %arg1 : i32, i32
  }
}

</mosaic_0001>

<llo_original>
// kernel: tpu_custom_call.1
$region0: #{tpu_custom_call.1}
  #allocation0 [shape = 'u32[]', space=smem, size = 0x4, offset = 0x4, fixed_abs, tag = 'smem constant byte address 0x4 - core index']
  #allocation1 [shape = 'u32[72,128]{1,0:T(1,128)}', space=vmem, size = 0x9000, scoped, tag = 'internal scratch']
  %s0 = inlined_call_operand.vmem [shape: s32[16,1], index: 0, kind: input, shape index: {}]
  %s1 = inlined_call_operand.hbm [shape: f32[16,32], index: 1, kind: output, shape index: {}]
  %s2 = sld [smem:[#allocation0]]
  $region14: #{tpu_custom_call.1} parent=0
    _
  %s4 = ssub.s32 1, %s2
  %s5 = scalar_select 0, %s4, %s2
  $region1: #{tpu_custom_call.1} parent=0
    #allocation2 [shape = 'u8[8192]{0}', space=vmem, size = 0x2000, scoped, tag = 'output window, operand 0, single buffered']
    #allocation3 [shape = 's32[1]{0}', space=sflag, size = 0x4, scoped, tag = 'scoped memory for tpu_custom_call.1']
    %6 = vsyncpa [#allocation3], 0
    // Predicated region
    $region2: #{tpu_custom_call.1} parent=1 // pred_check
      _
    $region3: #{tpu_custom_call.1} parent=1 // pred_check_branch
      %8 = sbr.rel (0) target = $region5
    $region4: #{tpu_custom_call.1} parent=1 // pred_region
      _
    $region5: #{tpu_custom_call.1} parent=1 // pred_fallthru
      _
    %s9 = smul.u32 0, 32
    %v10 = vld [vmem:[%s0] sm:$0xff]
    %v11 = vld [vmem:[%s0 + $0x8] sm:$0xff]
    %v12 = vstv %s9
    %v13 = vsub.s32 %v10, %v12
    %v14 = vsub.s32 %v11, %v12
    %v15 = vlaneseq
    %v16 = vand.u32 %v15, 127
    %17 = vset.pattern.permute.xlu0 0
    %18 = vperm.xlu0 %17, %v13
    %v19 = vpop.permute.xlu0 %18
    %20 = vset.pattern.permute.xlu0 0
    %21 = vperm.xlu0 %20, %v14
    %v22 = vpop.permute.xlu0 %21
    %vm23 = vcmp.eq.s32.totalorder %v19, %v16
    %vm24 = vcmp.eq.s32.totalorder %v22, %v16
    %v25 = vsel %vm23, 1, 0
    %v26 = vsel %vm24, 1, 0
    %v27 = vcvt.s32.f32 %v25
    %v28 = vcvt.s32.f32 %v26
    %vm29 = vcmask 261120
    %30 = vst.msk [vmem:[#allocation2] sm:$0xff] %vm29, %v27
    %31 = vst.msk [vmem:[#allocation2 + $0x8] sm:$0xff] %vm29, %v28
    // Predicated region
    $region6: #{tpu_custom_call.1} parent=1 // pred_check
      _
    $region7: #{tpu_custom_call.1} parent=1 // pred_check_branch
      %33 = sbr.rel (0) target = $region9
    $region8: #{tpu_custom_call.1} parent=1 // pred_region
      %35 = vsyncadd [#allocation3], 0
      %s36 = sshll.u32 [#allocation2], 4
      %s37 = int_to_ptr.vmem [resolvable:$true] %s36
      %s38 = sshll.u32 %s1, 4
      %s39 = int_to_ptr.hbm [resolvable:$true] %s38
      %44 = dma.vmem_to_hbm [thread:$0]  %s37, 256, %s39, [#allocation3], 128, 128, 8
    $region9: #{tpu_custom_call.1} parent=1 // pred_fallthru
      _
    // Predicated region
    $region10: #{tpu_custom_call.1} parent=1 // pred_check
      _
    $region11: #{tpu_custom_call.1} parent=1 // pred_check_branch
      %46 = sbr.rel (0) target = $region13
    $region12: #{tpu_custom_call.1} parent=1 // pred_region
      %48 = dma.done [#allocation3], 256
    $region13: #{tpu_custom_call.1} parent=1 // pred_fallthru
      _
    %49 = vsyncpa [#allocation3], 1

</llo_original>
